<compile_context>
chip_gen: v5e
topology: v5e:2x2
jax: 0.10.0
libtpu: 0.0.40
codegen_flags: <defaults>
</compile_context>

<pallas_src>
import jax
import jax.numpy as jnp
from jax.experimental import pallas as pl
from jax.experimental.pallas import tpu as pltpu


def _round_up(x: int, m: int) -> int:
    return (x + m - 1) // m * m


def hypernet_kernel(x_ref, w1_ref, b1_ref, w2_ref, b2_ref, out_ref):
    # h = relu(x @ W1 + b1): MXU matmul with f32 accumulation, elementwise in f32.
    h = jnp.dot(x_ref[...], w1_ref[...], preferred_element_type=jnp.float32)
    h = jnp.maximum(h + b1_ref[...], 0.0)      # b1 is (1, hidden) -> broadcasts
    # out = h @ W2 + b2 (cast h to the weight dtype so bf16 weights hit the
    # bf16 MXU path; accumulation stays f32).
    o = jnp.dot(h.astype(w2_ref.dtype), w2_ref[...],
                preferred_element_type=jnp.float32)
    out_ref[...] = (o + b2_ref[...]).astype(out_ref.dtype)


def hypernetwork_forward(x, w1, b1, w2, b2, *, compute_dtype=None,
                         block_batch=128):
    """Fused MLP forward: relu(x @ w1 + b1) @ w2 + b2.

    x:  [B, in_dim]
    w1: [in_dim, hidden], b1: [hidden]
    w2: [hidden, out_dim], b2: [out_dim]
    compute_dtype: optional low-precision dtype (e.g. jnp.bfloat16) for the
      MXU operands x/w1/w2; accumulation, bias add and ReLU stay in f32.
    """
    out_dtype = x.dtype
    B, in_dim = x.shape
    hidden = w1.shape[1]
    out_dim = w2.shape[1]
    lane = 128

    # Biases as (1, n) rows in f32 (elementwise path stays f32 even in bf16 mode).
    b1 = b1.reshape(1, -1).astype(jnp.float32)
    b2 = b2.reshape(1, -1).astype(jnp.float32)

    # --- Lane-pad hidden / output dims to multiples of 128 (zero padding is exact).
    hidden_p = _round_up(hidden, lane)
    out_p = _round_up(out_dim, lane)
    if hidden_p != hidden:
        w1 = jnp.pad(w1, ((0, 0), (0, hidden_p - hidden)))
        b1 = jnp.pad(b1, ((0, 0), (0, hidden_p - hidden)))
        w2 = jnp.pad(w2, ((0, hidden_p - hidden), (0, 0)))
    if out_p != out_dim:
        w2 = jnp.pad(w2, ((0, 0), (0, out_p - out_dim)))
        b2 = jnp.pad(b2, ((0, 0), (0, out_p - out_dim)))

    # --- Batch tiling: sublane-aligned tile, pad B up to a multiple of it.
    tm = min(block_batch, _round_up(B, 8))
    b_pad = _round_up(B, tm)
    if b_pad != B:
        x = jnp.pad(x, ((0, b_pad - B), (0, 0)))

    # Optional bf16 MXU operands (f32 accumulation inside the kernel).
    if compute_dtype is not None:
        x = x.astype(compute_dtype)
        w1 = w1.astype(compute_dtype)
        w2 = w2.astype(compute_dtype)

    grid = (b_pad // tm,)

    flops = 2 * b_pad * (in_dim * hidden_p + hidden_p * out_p)
    bytes_accessed = (
        x.size * x.dtype.itemsize
        + w1.size * w1.dtype.itemsize
        + w2.size * w2.dtype.itemsize
        + b1.size * 4 + b2.size * 4
        + b_pad * out_p * jnp.dtype(out_dtype).itemsize)

    out_padded = pl.pallas_call(
        hypernet_kernel,
        out_shape=jax.ShapeDtypeStruct((b_pad, out_p), out_dtype),
        grid=grid,
        in_specs=[
            pl.BlockSpec((tm, in_dim), lambda i: (i, 0)),        # x: tiled over batch
            pl.BlockSpec((in_dim, hidden_p), lambda i: (0, 0)),  # W1: VMEM-resident
            pl.BlockSpec((1, hidden_p), lambda i: (0, 0)),       # b1: VMEM-resident
            pl.BlockSpec((hidden_p, out_p), lambda i: (0, 0)),   # W2: VMEM-resident
            pl.BlockSpec((1, out_p), lambda i: (0, 0)),          # b2: VMEM-resident
        ],
        out_specs=pl.BlockSpec((tm, out_p), lambda i: (i, 0)),
        compiler_params=pltpu.CompilerParams(
            dimension_semantics=("parallel",)),
        cost_estimate=pl.CostEstimate(
            flops=flops, transcendentals=0, bytes_accessed=bytes_accessed),
    )(x, w1, b1, w2, b2)

    # Slice off batch / lane padding.
    return out_padded[:B, :out_dim]


def init_linear_params(key, in_features, out_features, dtype=jnp.float32):
    """Init mimicking PyTorch nn.Linear default (uniform +/- 1/sqrt(fan_in))."""
    kw, kb = jax.random.split(key)
    bound = 1.0 / jnp.sqrt(jnp.asarray(in_features, dtype))
    # stored as [in, out] for direct x @ W
    w = jax.random.uniform(kw, (in_features, out_features), dtype, -bound, bound)
    b = jax.random.uniform(kb, (out_features,), dtype, -bound, bound)
    return w, b


if __name__ == "__main__":
    key = jax.random.PRNGKey(0)
    k_x, k_l1, k_l2, k_x2 = jax.random.split(key, 4)

    input_dim, hidden_dim, output_dim = 32, 64, 16

    w1, b1 = init_linear_params(k_l1, input_dim, hidden_dim)
    w2, b2 = init_linear_params(k_l2, hidden_dim, output_dim)

    def reference(xx):
        return jnp.maximum(xx @ w1 + b1, 0.0) @ w2 + b2

    # Small batch, matching the original module's typical usage.
    x_small = jax.random.normal(k_x, (2, input_dim), jnp.float32)
    out_small = jax.block_until_ready(hypernetwork_forward(x_small, w1, b1, w2, b2))
    assert out_small.shape == (2, output_dim)
    assert jnp.allclose(out_small, reference(x_small), atol=1e-5, rtol=1e-5)

    # Larger, non-tile-aligned batch: exercises the batch grid + padding path.
    x_big = jax.random.normal(k_x2, (300, input_dim), jnp.float32)
    out_big = jax.block_until_ready(hypernetwork_forward(x_big, w1, b1, w2, b2))
    assert out_big.shape == (300, output_dim)
    assert jnp.allclose(out_big, reference(x_big), atol=1e-4, rtol=1e-4)

    # bf16 MXU operands with f32 accumulation (fast path on v5e/v6e/v7x).
    out_bf16 = jax.block_until_ready(
        hypernetwork_forward(x_big, w1, b1, w2, b2, compute_dtype=jnp.bfloat16))
    assert jnp.allclose(out_bf16, reference(x_big), atol=5e-2, rtol=5e-2)

    print("KERNEL_OK")
</pallas_src>

<mosaic_0001>
module attributes {stable_mosaic.version = 11 : i64} {
  func.func @hypernet_kernel(%arg0: i32, %arg1: memref<8x32xf32, #tpu.memory_space<vmem>>, %arg2: memref<32x128xf32, #tpu.memory_space<vmem>>, %arg3: memref<1x128xf32, #tpu.memory_space<vmem>>, %arg4: memref<128x128xf32, #tpu.memory_space<vmem>>, %arg5: memref<1x128xf32, #tpu.memory_space<vmem>>, %arg6: memref<8x128xf32, #tpu.memory_space<vmem>>) attributes {dimension_semantics = [#tpu.dimension_semantics<parallel>], iteration_bounds = array<i64: 1>, scalar_prefetch = 0 : i64, scratch_operands = 0 : i64, tpu.core_type = #tpu.core_type<tc>, window_params = [{transform_indices = @transform_0, window_bounds = array<i64: 8, 32>}, {pipeline_mode = #tpu.pipeline_mode<synchronous>, transform_indices = @transform_1, window_bounds = array<i64: 32, 128>}, {pipeline_mode = #tpu.pipeline_mode<synchronous>, transform_indices = @transform_2, window_bounds = array<i64: 1, 128>}, {pipeline_mode = #tpu.pipeline_mode<synchronous>, transform_indices = @transform_3, window_bounds = array<i64: 128, 128>}, {pipeline_mode = #tpu.pipeline_mode<synchronous>, transform_indices = @transform_4, window_bounds = array<i64: 1, 128>}, {transform_indices = @transform_5, window_bounds = array<i64: 8, 128>}]} {
    %c0 = arith.constant 0 : index
    %c0_0 = arith.constant 0 : index
    %0 = vector.load %arg1[%c0, %c0_0] : memref<8x32xf32, #tpu.memory_space<vmem>>, vector<8x32xf32>
    %c0_1 = arith.constant 0 : index
    %c0_2 = arith.constant 0 : index
    %1 = vector.load %arg2[%c0_1, %c0_2] : memref<32x128xf32, #tpu.memory_space<vmem>>, vector<32x128xf32>
    %cst = arith.constant dense<0.000000e+00> : vector<8x128xf32>
    %2 = tpu.matmul %0, %1, %cst {dimension_numbers = #tpu.dot_dimension_numbers<[1], [0], [0], [1], [0, 0, 1, 1], [], []>} : vector<8x32xf32>, vector<32x128xf32>, vector<8x128xf32> -> vector<8x128xf32>
    %c0_3 = arith.constant 0 : index
    %c0_4 = arith.constant 0 : index
    %3 = vector.load %arg3[%c0_3, %c0_4] : memref<1x128xf32, #tpu.memory_space<vmem>>, vector<1x128xf32>
    %4 = vector.broadcast %3 : vector<1x128xf32> to vector<8x128xf32>
    %5 = arith.addf %2, %4 : vector<8x128xf32>
    %cst_5 = arith.constant 0.000000e+00 : f32
    %6 = vector.broadcast %cst_5 : f32 to vector<8x128xf32>
    %7 = arith.maximumf %5, %6 : vector<8x128xf32>
    %c0_6 = arith.constant 0 : index
    %c0_7 = arith.constant 0 : index
    %8 = vector.load %arg4[%c0_6, %c0_7] : memref<128x128xf32, #tpu.memory_space<vmem>>, vector<128x128xf32>
    %cst_8 = arith.constant dense<0.000000e+00> : vector<8x128xf32>
    %9 = tpu.matmul %7, %8, %cst_8 {dimension_numbers = #tpu.dot_dimension_numbers<[1], [0], [0], [1], [0, 0, 1, 1], [], []>} : vector<8x128xf32>, vector<128x128xf32>, vector<8x128xf32> -> vector<8x128xf32>
    %c0_9 = arith.constant 0 : index
    %c0_10 = arith.constant 0 : index
    %10 = vector.load %arg5[%c0_9, %c0_10] : memref<1x128xf32, #tpu.memory_space<vmem>>, vector<1x128xf32>
    %11 = vector.broadcast %10 : vector<1x128xf32> to vector<8x128xf32>
    %12 = arith.addf %9, %11 : vector<8x128xf32>
    %c0_11 = arith.constant 0 : index
    %c0_12 = arith.constant 0 : index
    %13 = vector.load %arg6[%c0_11, %c0_12] : memref<8x128xf32, #tpu.memory_space<vmem>>, vector<8x128xf32>
    tpu.vector_store %arg6[%c0_11, %c0_12], %12 {strides = array<i32>} : memref<8x128xf32, #tpu.memory_space<vmem>>, vector<8x128xf32>,
    return
  }
  func.func @transform_0(%arg0: i32) -> (i32, i32) {
    %c0_i32 = arith.constant 0 : i32
    %c0_i32_0 = arith.constant 0 : i32
    return %arg0, %c0_i32 : i32, i32
  }
  func.func @transform_1(%arg0: i32) -> (i32, i32) {
    %c0_i32 = arith.constant 0 : i32
    %c0_i32_0 = arith.constant 0 : i32
    %c0_i32_1 = arith.constant 0 : i32
    return %c0_i32, %c0_i32_0 : i32, i32
  }
  func.func @transform_2(%arg0: i32) -> (i32, i32) {
    %c0_i32 = arith.constant 0 : i32
    %c0_i32_0 = arith.constant 0 : i32
    %c0_i32_1 = arith.constant 0 : i32
    return %c0_i32, %c0_i32_0 : i32, i32
  }
  func.func @transform_3(%arg0: i32) -> (i32, i32) {
    %c0_i32 = arith.constant 0 : i32
    %c0_i32_0 = arith.constant 0 : i32
    %c0_i32_1 = arith.constant 0 : i32
    return %c0_i32, %c0_i32_0 : i32, i32
  }
  func.func @transform_4(%arg0: i32) -> (i32, i32) {
    %c0_i32 = arith.constant 0 : i32
    %c0_i32_0 = arith.constant 0 : i32
    %c0_i32_1 = arith.constant 0 : i32
    return %c0_i32, %c0_i32_0 : i32, i32
  }
  func.func @transform_5(%arg0: i32) -> (i32, i32) {
    %c0_i32 = arith.constant 0 : i32
    %c0_i32_0 = arith.constant 0 : i32
    return %arg0, %c0_i32 : i32, i32
  }
}

</mosaic_0001>

<llo_original>
// kernel: tpu_custom_call.1
$region0: #{tpu_custom_call.1}
  #allocation0 [shape = 'u32[]', space=smem, size = 0x4, offset = 0x4, fixed_abs, tag = 'smem constant byte address 0x4 - core index']
  #allocation1 [shape = 'u32[72,128]{1,0:T(1,128)}', space=vmem, size = 0x9000, scoped, tag = 'internal scratch']
  %s0 = inlined_call_operand.hbm [shape: f32[8,32], index: 0, kind: input, shape index: {}]
  %s1 = inlined_call_operand.hbm [shape: f32[32,128], index: 1, kind: input, shape index: {}]
  %s2 = inlined_call_operand.vmem [shape: f32[1,128], index: 2, kind: input, shape index: {}]
  %s3 = inlined_call_operand.hbm [shape: f32[128,128], index: 3, kind: input, shape index: {}]
  %s4 = inlined_call_operand.vmem [shape: f32[1,128], index: 4, kind: input, shape index: {}]
  %s5 = inlined_call_operand.hbm [shape: f32[8,128], index: 5, kind: output, shape index: {}]
  %s6 = sld [smem:[#allocation0]]
  $region42: #{tpu_custom_call.1} parent=0
    _
  %s8 = ssub.s32 1, %s6
  %s9 = scalar_select 0, %s8, %s6
  $region1: #{tpu_custom_call.1} parent=0
    #allocation2 [shape = 'u8[4096]{0}', space=vmem, size = 0x1000, scoped, tag = 'input window, operand 0, single buffered']
    #allocation3 [shape = 's32[1]{0}', space=sflag, size = 0x4, scoped, tag = 'scoped memory for tpu_custom_call.1']
    #allocation4 [shape = 's32[1]{0}', space=sflag, size = 0x4, scoped, tag = 'scoped memory for tpu_custom_call.1']
    #allocation5 [shape = 'u8[16384]{0}', space=vmem, size = 0x4000, scoped, tag = 'input window, operand 1, single buffered']
    #allocation6 [shape = 's32[1]{0}', space=sflag, size = 0x4, scoped, tag = 'scoped memory for tpu_custom_call.1']
    #allocation7 [shape = 'u8[65536]{0}', space=vmem, size = 0x10000, scoped, tag = 'input window, operand 3, single buffered']
    #allocation8 [shape = 'u8[4096]{0}', space=vmem, size = 0x1000, scoped, tag = 'output window, operand 0, single buffered']
    %10 = vsyncpa [#allocation3], 0
    %11 = vsyncpa [#allocation6], 0
    %12 = vsyncpa [#allocation4], 0
    // Predicated region
    $region2: #{tpu_custom_call.1} parent=1 // pred_check
      _
    $region3: #{tpu_custom_call.1} parent=1 // pred_check_branch
      %14 = sbr.rel (0) target = $region5
    $region4: #{tpu_custom_call.1} parent=1 // pred_region
      %16 = vsyncadd [#allocation3], 0
      %s18 = sshll.u32 %s0, 4
      %s19 = int_to_ptr.hbm [resolvable:$true] %s18
      %s20 = sshll.u32 [#allocation2], 4
      %s21 = int_to_ptr.vmem [resolvable:$true] %s20
      %23 = dma.hbm_to_vmem [thread:$0]  %s19, 128, %s21, [#allocation3]
    $region5: #{tpu_custom_call.1} parent=1 // pred_fallthru
      _
    // Predicated region
    $region6: #{tpu_custom_call.1} parent=1 // pred_check
      _
    $region7: #{tpu_custom_call.1} parent=1 // pred_check_branch
      %25 = sbr.rel (0) target = $region9
    $region8: #{tpu_custom_call.1} parent=1 // pred_region
      %27 = vsyncadd [#allocation6], 0
      %s28 = sshll.u32 %s1, 4
      %s29 = int_to_ptr.hbm [resolvable:$true] %s28
      %s30 = sshll.u32 [#allocation5], 4
      %s31 = int_to_ptr.vmem [resolvable:$true] %s30
      %36 = dma.hbm_to_vmem [thread:$0]  %s29, 512, %s31, [#allocation6], 128, 128, 8
    $region9: #{tpu_custom_call.1} parent=1 // pred_fallthru
      _
    // Predicated region
    $region10: #{tpu_custom_call.1} parent=1 // pred_check
      _
    $region11: #{tpu_custom_call.1} parent=1 // pred_check_branch
      %38 = sbr.rel (0) target = $region13
    $region12: #{tpu_custom_call.1} parent=1 // pred_region
      _
    $region13: #{tpu_custom_call.1} parent=1 // pred_fallthru
      _
    // Predicated region
    $region14: #{tpu_custom_call.1} parent=1 // pred_check
      _
    $region15: #{tpu_custom_call.1} parent=1 // pred_check_branch
      %40 = sbr.rel (0) target = $region17
    $region16: #{tpu_custom_call.1} parent=1 // pred_region
      %42 = vsyncadd [#allocation6], 0
      %s43 = sshll.u32 %s3, 4
      %s44 = int_to_ptr.hbm [resolvable:$true] %s43
      %s45 = sshll.u32 [#allocation7], 4
      %s46 = int_to_ptr.vmem [resolvable:$true] %s45
      %51 = dma.hbm_to_vmem [thread:$0]  %s44, 2048, %s46, [#allocation6], 128, 128, 8
    $region17: #{tpu_custom_call.1} parent=1 // pred_fallthru
      _
    // Predicated region
    $region18: #{tpu_custom_call.1} parent=1 // pred_check
      _
    $region19: #{tpu_custom_call.1} parent=1 // pred_check_branch
      %53 = sbr.rel (0) target = $region21
    $region20: #{tpu_custom_call.1} parent=1 // pred_region
      _
    $region21: #{tpu_custom_call.1} parent=1 // pred_fallthru
      _
    // Predicated region
    $region22: #{tpu_custom_call.1} parent=1 // pred_check
      _
    $region23: #{tpu_custom_call.1} parent=1 // pred_check_branch
      %55 = sbr.rel (0) target = $region25
    $region24: #{tpu_custom_call.1} parent=1 // pred_region
      %57 = dma.done [#allocation3], 128
    $region25: #{tpu_custom_call.1} parent=1 // pred_fallthru
      _
    // Predicated region
    $region26: #{tpu_custom_call.1} parent=1 // pred_check
      _
    $region27: #{tpu_custom_call.1} parent=1 // pred_check_branch
      %59 = sbr.rel (0) target = $region29
    $region28: #{tpu_custom_call.1} parent=1 // pred_region
      %61 = dma.done [#allocation6], 512
    $region29: #{tpu_custom_call.1} parent=1 // pred_fallthru
      _
    // Predicated region
    $region30: #{tpu_custom_call.1} parent=1 // pred_check
      _
    $region31: #{tpu_custom_call.1} parent=1 // pred_check_branch
      %63 = sbr.rel (0) target = $region33
    $region32: #{tpu_custom_call.1} parent=1 // pred_region
      %65 = dma.done [#allocation6], 2048
    $region33: #{tpu_custom_call.1} parent=1 // pred_fallthru
      _
    %v66 = vld [vmem:[#allocation2] sm:$0xff]
    %v67 = vld [vmem:[#allocation5] sm:$0xff]
    %v68 = vld [vmem:[#allocation5 + $0x8] sm:$0xff]
    %v69 = vld [vmem:[#allocation5 + $0x10] sm:$0xff]
    %v70 = vld [vmem:[#allocation5 + $0x18] sm:$0xff]
    %v71 = vld [vmem:[%s2] sm:$0x1]
    %v73 = vperm.slane %v71, 0
    %vm75 = vcmask 261120
    %v77 = vsel %vm75, %v66, 0
    %79 = vmatpush.msra.mxu0 0.0
    %80 = vmatpush.msra.mxu0 0.0
    %81 = vmatpush.msra.mxu0 0.0
    %82 = vmatpush.msra.mxu0 0.0
    %83 = vmatpush.msra.mxu0 0.0
    %84 = vmatpush.msra.mxu0 0.0
    %85 = vmatpush.msra.mxu0 0.0
    %86 = vmatpush.msra.mxu0 0.0
    %87 = vmatpush.msra.mxu0 0.0
    %88 = vmatpush.msra.mxu0 0.0
    %89 = vmatpush.msra.mxu0 0.0
    %90 = vmatpush.msra.mxu0 0.0
    %91 = vmatpush.msra.mxu0 %v70
    %92 = vmatpush.msra.mxu0 %v69
    %93 = vmatpush.msra.mxu0 %v68
    %94 = vmatpush.msra.mxu0 %v67
    %95 = vmatmul.f32.gmra.mxu0 %v77
    %v96 = vpop.f32.mrf.mxu0
    %v97 = vadd.f32 %v73, %v96
    %98 = vdwg.mxu0
    %v99 = vmax.f32 %v97, 0.0
    %v100 = vld [vmem:[#allocation7] sm:$0xff]
    %v101 = vld [vmem:[#allocation7 + $0x8] sm:$0xff]
    %v102 = vld [vmem:[#allocation7 + $0x10] sm:$0xff]
    %v103 = vld [vmem:[#allocation7 + $0x18] sm:$0xff]
    %v104 = vld [vmem:[#allocation7 + $0x20] sm:$0xff]
    %v105 = vld [vmem:[#allocation7 + $0x28] sm:$0xff]
    %v106 = vld [vmem:[#allocation7 + $0x30] sm:$0xff]
    %v107 = vld [vmem:[#allocation7 + $0x38] sm:$0xff]
    %v108 = vld [vmem:[#allocation7 + $0x40] sm:$0xff]
    %v109 = vld [vmem:[#allocation7 + $0x48] sm:$0xff]
    %v110 = vld [vmem:[#allocation7 + $0x50] sm:$0xff]
    %v111 = vld [vmem:[#allocation7 + $0x58] sm:$0xff]
    %v112 = vld [vmem:[#allocation7 + $0x60] sm:$0xff]
    %v113 = vld [vmem:[#allocation7 + $0x68] sm:$0xff]
    %v114 = vld [vmem:[#allocation7 + $0x70] sm:$0xff]
    %v115 = vld [vmem:[#allocation7 + $0x78] sm:$0xff]
    %v116 = vld [vmem:[%s4] sm:$0x1]
    %v118 = vperm.slane %v116, 0
    %120 = vmatpush.msra.mxu0 %v115
    %121 = vmatpush.msra.mxu0 %v114
    %122 = vmatpush.msra.mxu0 %v113
    %123 = vmatpush.msra.mxu0 %v112
    %124 = vmatpush.msra.mxu0 %v111
    %125 = vmatpush.msra.mxu0 %v110
    %126 = vmatpush.msra.mxu0 %v109
    %127 = vmatpush.msra.mxu0 %v108
    %128 = vmatpush.msra.mxu0 %v107
    %129 = vmatpush.msra.mxu0 %v106
    %130 = vmatpush.msra.mxu0 %v105
    %131 = vmatpush.msra.mxu0 %v104
    %132 = vmatpush.msra.mxu0 %v103
    %133 = vmatpush.msra.mxu0 %v102
    %134 = vmatpush.msra.mxu0 %v101
    %135 = vmatpush.msra.mxu0 %v100
    %136 = vmatmul.f32.gmra.mxu0 %v99
    %v137 = vpop.f32.mrf.mxu0
    %v138 = vadd.f32 %v118, %v137
    %139 = vdwg.mxu0
    %140 = vst [vmem:[#allocation8] sm:$0xff] %v138
    // Predicated region
    $region34: #{tpu_custom_call.1} parent=1 // pred_check
      _
    $region35: #{tpu_custom_call.1} parent=1 // pred_check_branch
      %142 = sbr.rel (0) target = $region37
    $region36: #{tpu_custom_call.1} parent=1 // pred_region
      %144 = vsyncadd [#allocation4], 0
      %s146 = sshll.u32 [#allocation8], 4
      %s147 = int_to_ptr.vmem [resolvable:$true] %s146
      %s148 = sshll.u32 %s5, 4
      %s149 = int_to_ptr.hbm [resolvable:$true] %s148
      %151 = dma.vmem_to_hbm [thread:$0]  %s147, 128, %s149, [#allocation4]
    $region37: #{tpu_custom_call.1} parent=1 // pred_fallthru
      _
    // Predicated region
    $region38: #{tpu_custom_call.1} parent=1 // pred_check
      _
    $region39: #{tpu_custom_call.1} parent=1 // pred_check_branch
      %153 = sbr.rel (0) target = $region41
    $region40: #{tpu_custom_call.1} parent=1 // pred_region
      %155 = dma.done [#allocation4], 128
    $region41: #{tpu_custom_call.1} parent=1 // pred_fallthru
      _
    %156 = vsyncpa [#allocation3], 1
    %157 = vsyncpa [#allocation6], 1
    %158 = vsyncpa [#allocation4], 1

</llo_original>
